<compile_context>
chip_gen: v7x
topology: tpu7x:2x2x1
jax: 0.10.0
libtpu: 0.0.40
codegen_flags: <defaults>
</compile_context>

<pallas_src>
import math

import jax
import jax.numpy as jnp
from jax.experimental import pallas as pl
from jax.experimental.pallas import tpu as pltpu

_INV_SQRT2 = 1.0 / math.sqrt(2.0)


def _fused_mlp_kernel(x_ref, w1_ref, b1_ref, w2_ref, b2_ref, o_ref):
    """Fused LandmarkMLP forward.

    x_ref  : [B, G*D_in]   row-major flatten of x[b, g, d]
    w1_ref : [G*D_in, G*H] block-diagonal expansion of W1 (trace-time)
    b1_ref : [1, G*H]      b1 tiled G times
    w2_ref : [G*H, C]      out_fc weight (as stored, [in, out])
    b2_ref : [1, C]
    o_ref  : [B, C]
    """
    # --- stage 1: single MXU push -> lane-dense hidden, exact (erf) GELU ---
    h = jnp.dot(x_ref[...], w1_ref[...],
                preferred_element_type=jnp.float32) + b1_ref[...]
    h = 0.5 * h * (1.0 + jax.lax.erf(h * _INV_SQRT2))  # nn.GELU() default (erf)
    # (tanh-approx GELU is the cheaper EUP path once B*G*H grows.)

    # --- stage 2: single K = G*H MXU push, bias fused into the epilogue ---
    o_ref[...] = (jnp.dot(h, w2_ref[...],
                          preferred_element_type=jnp.float32)
                  + b2_ref[...]).astype(o_ref.dtype)


def landmark_mlp_forward(x, params):
    """x: [B, G, D_in] float32  ->  [B, num_classes] float32"""
    w1, b1, w2, b2 = params["w1"], params["b1"], params["w2"], params["b2"]
    B, G, D_in = x.shape
    H = w1.shape[1]
    C = w2.shape[1]

    # Free row-major flatten of the activations (no transpose, no HBM relayout).
    x_flat = x.reshape(B, G * D_in)

    # Trace-time weight plumbing (tiny: [G*D_in, G*H] = 256x256 here).
    # Block-diag W1 makes stage 1 emit h already in torch's .view(B,-1) order.
    w1_bd = jnp.kron(jnp.eye(G, dtype=w1.dtype), w1)       # [G*D_in, G*H]
    b1_flat = jnp.tile(b1, G).reshape(1, G * H)             # [1, G*H]
    b2_2d = b2.reshape(1, C)                                 # [1, C]

    vmem = pl.BlockSpec(memory_space=pltpu.MemorySpace.VMEM)

    # Single launch, no grid: whole problem fits trivially in VMEM, the hidden
    # activation never touches HBM.  (Scale-up: add a "parallel" M grid axis
    # for v7x's 2 TCs and re-budget tiles for 64 MiB VMEM; see header note.)
    return pl.pallas_call(
        _fused_mlp_kernel,
        out_shape=jax.ShapeDtypeStruct((B, C), jnp.float32),
        in_specs=[vmem, vmem, vmem, vmem, vmem],
        out_specs=vmem,
    )(x_flat, w1_bd, b1_flat, w2, b2_2d)


def init_params(key, in_dim, num_classes, hidden_dim, grid_size):
    """Deterministic init mirroring nn.Linear shapes (stored transposed: [in, out])."""
    k1, k2, k3, k4 = jax.random.split(key, 4)
    lim1 = 1.0 / math.sqrt(in_dim)
    lim2 = 1.0 / math.sqrt(hidden_dim * grid_size)
    return {
        "w1": jax.random.uniform(k1, (in_dim, hidden_dim), jnp.float32, -lim1, lim1),
        "b1": jax.random.uniform(k2, (hidden_dim,), jnp.float32, -lim1, lim1),
        "w2": jax.random.uniform(
            k3, (hidden_dim * grid_size, num_classes), jnp.float32, -lim2, lim2
        ),
        "b2": jax.random.uniform(k4, (num_classes,), jnp.float32, -lim2, lim2),
    }


if __name__ == "__main__":
    # Small shapes consistent with the module's forward:
    B, G, D_in, H, C = 2, 8, 32, 32, 16

    key = jax.random.PRNGKey(0)
    kx, kp = jax.random.split(key)
    x = jax.random.normal(kx, (B, G, D_in), dtype=jnp.float32)
    params = init_params(kp, in_dim=D_in, num_classes=C, hidden_dim=H, grid_size=G)

    fwd = jax.jit(landmark_mlp_forward)
    out = fwd(x, params)
    out = jax.block_until_ready(out)

    # sanity: pure-JAX reference of the same math (torch LandmarkMLP forward)
    h_ref = jax.nn.gelu(x @ params["w1"] + params["b1"], approximate=False)
    ref = h_ref.reshape(B, -1) @ params["w2"] + params["b2"]
    assert out.shape == (B, C)
    assert jnp.allclose(out, ref, atol=1e-4, rtol=1e-4)

    print("KERNEL_OK")
</pallas_src>

<mosaic_0001>
module attributes {stable_mosaic.version = 11 : i64} {
  func.func @_fused_mlp_kernel(%arg0: memref<2x256xf32, #tpu.memory_space<vmem>>, %arg1: memref<256x256xf32, #tpu.memory_space<vmem>>, %arg2: memref<1x256xf32, #tpu.memory_space<vmem>>, %arg3: memref<256x16xf32, #tpu.memory_space<vmem>>, %arg4: memref<1x16xf32, #tpu.memory_space<vmem>>, %arg5: memref<2x16xf32, #tpu.memory_space<vmem>>) attributes {dimension_semantics = [], scalar_prefetch = 0 : i64, scratch_operands = 0 : i64, tpu.core_type = #tpu.core_type<tc>} {
    %c0 = arith.constant 0 : index
    %c0_0 = arith.constant 0 : index
    %0 = vector.load %arg0[%c0, %c0_0] : memref<2x256xf32, #tpu.memory_space<vmem>>, vector<2x256xf32>
    %c0_1 = arith.constant 0 : index
    %c0_2 = arith.constant 0 : index
    %1 = vector.load %arg1[%c0_1, %c0_2] : memref<256x256xf32, #tpu.memory_space<vmem>>, vector<256x256xf32>
    %cst = arith.constant dense<0.000000e+00> : vector<2x256xf32>
    %2 = tpu.matmul %0, %1, %cst {dimension_numbers = #tpu.dot_dimension_numbers<[1], [0], [0], [1], [0, 0, 1, 1], [], []>} : vector<2x256xf32>, vector<256x256xf32>, vector<2x256xf32> -> vector<2x256xf32>
    %c0_3 = arith.constant 0 : index
    %c0_4 = arith.constant 0 : index
    %3 = vector.load %arg2[%c0_3, %c0_4] : memref<1x256xf32, #tpu.memory_space<vmem>>, vector<1x256xf32>
    %4 = vector.broadcast %3 : vector<1x256xf32> to vector<2x256xf32>
    %5 = arith.addf %2, %4 : vector<2x256xf32>
    %cst_5 = arith.constant 5.000000e-01 : f32
    %6 = vector.broadcast %cst_5 : f32 to vector<2x256xf32>
    %7 = arith.mulf %6, %5 : vector<2x256xf32>
    %cst_6 = arith.constant 0.707106769 : f32
    %8 = vector.broadcast %cst_6 : f32 to vector<2x256xf32>
    %9 = arith.mulf %5, %8 : vector<2x256xf32>
    %10 = math.erf %9 : vector<2x256xf32>
    %cst_7 = arith.constant 1.000000e+00 : f32
    %11 = vector.broadcast %cst_7 : f32 to vector<2x256xf32>
    %12 = arith.addf %11, %10 : vector<2x256xf32>
    %13 = arith.mulf %7, %12 : vector<2x256xf32>
    %c0_8 = arith.constant 0 : index
    %c0_9 = arith.constant 0 : index
    %14 = vector.load %arg3[%c0_8, %c0_9] : memref<256x16xf32, #tpu.memory_space<vmem>>, vector<256x16xf32>
    %cst_10 = arith.constant dense<0.000000e+00> : vector<2x16xf32>
    %15 = tpu.matmul %13, %14, %cst_10 {dimension_numbers = #tpu.dot_dimension_numbers<[1], [0], [0], [1], [0, 0, 1, 1], [], []>} : vector<2x256xf32>, vector<256x16xf32>, vector<2x16xf32> -> vector<2x16xf32>
    %c0_11 = arith.constant 0 : index
    %c0_12 = arith.constant 0 : index
    %16 = vector.load %arg4[%c0_11, %c0_12] : memref<1x16xf32, #tpu.memory_space<vmem>>, vector<1x16xf32>
    %17 = vector.broadcast %16 : vector<1x16xf32> to vector<2x16xf32>
    %18 = arith.addf %15, %17 : vector<2x16xf32>
    %c0_13 = arith.constant 0 : index
    %c0_14 = arith.constant 0 : index
    %19 = vector.load %arg5[%c0_13, %c0_14] : memref<2x16xf32, #tpu.memory_space<vmem>>, vector<2x16xf32>
    tpu.vector_store %arg5[%c0_13, %c0_14], %18 {strides = array<i32>} : memref<2x16xf32, #tpu.memory_space<vmem>>, vector<2x16xf32>,
    return
  }
}

</mosaic_0001>

<llo_original>
// kernel: tile.8
$region0: #{tile.8}
  #allocation0 [shape = 's32[1]{0}', space=sflag, size = 0x4, scoped, tag = 'scoped memory for tile.8']
  %s0 = inlined_call_operand.vmem [shape: f32[32], index: 0, kind: input, shape index: {}]
  %s1 = inlined_call_operand.vmem [shape: f32[8,32], index: 1, kind: output, shape index: {}]
  // Predicated region
  $region2: #{tile.8} parent=0 // pred_check
    _
  $region3: #{tile.8} parent=0 // pred_check_branch
    %3 = sbr.rel (0) target = $region5
  $region4: #{tile.8} parent=0 // pred_region
    _
  $region5: #{tile.8} parent=0 // pred_fallthru
    _
  %v4 = vld [vmem:[%s0] ss:$0 sm:$0xff]
  %5 = vst [vmem:[%s1] sm:$0xff] %v4

// kernel: tile.9
$region0: #{tile.9}
  %s0 = inlined_call_operand.vmem [shape: f32[8,32], index: 0, kind: input, shape index: {}]
  %s1 = inlined_call_operand.vmem [shape: f32[1,256], index: 1, kind: output, shape index: {}]
  $region1: #{tile.9} parent=0
    #allocation0 [shape = 'u8[8192]{0}', space=vmem, size = 0x2000, scoped, tag = 'scoped mem for output reshape']
    %s2 = smov 3
    %v3 = vld [vmem:[%s0] ss:$4 sm:%s2]
    %vm4 = vcmask 261120
    %5 = vst.msk [vmem:[#allocation0] ss:$8 sm:$0x3] %vm4, %v3
    %s6 = scalar_lea.vmem %s0, 3
    %s7 = smov 3
    %v8 = vld [vmem:[%s6] ss:$4 sm:%s7]
    %9 = vrot.lane.b32.xlu0 %v8, 96
    %v10 = vpop.permute.xlu0 %9
    %vm11 = vcmask 1048320
    %12 = vst.msk [vmem:[#allocation0] ss:$8 sm:$0x3] %vm11, %v10
    %s13 = scalar_lea.vmem %s0, 2
    %s14 = smov 3
    %v15 = vld [vmem:[%s13] ss:$4 sm:%s14]
    %16 = vrot.lane.b32.xlu0 %v15, 64
    %v17 = vpop.permute.xlu0 %16
    %vm18 = vcmask 785920
    %19 = vst.msk [vmem:[#allocation0] ss:$8 sm:$0x3] %vm18, %v17
    %s20 = scalar_lea.vmem %s0, 1
    %s21 = smov 3
    %v22 = vld [vmem:[%s20] ss:$4 sm:%s21]
    %23 = vrot.lane.b32.xlu0 %v22, 32
    %v24 = vpop.permute.xlu0 %23
    %vm25 = vcmask 523520
    %26 = vst.msk [vmem:[#allocation0] ss:$8 sm:$0x3] %vm25, %v24
    %s28 = sshllo.u32 0, 1
    %v30 = vld [vmem:[#allocation0] sm:%s28]
    %s31 = sshllo.u32 0, 1
    %32 = vst [vmem:[%s1] sm:%s31] %v30
    %s33 = scalar_lea.vmem [#allocation0], 8
    %v34 = vld [vmem:[%s33] sm:%s28]
    %s35 = sshllo.u32 0, 1
    %s36 = scalar_lea.vmem %s1, 1
    %37 = vst [vmem:[%s36] sm:%s35] %v34

// kernel: landmark_mlp_forward.1
$region0: #{landmark_mlp_forward.1}
  #allocation0 [shape = 'u32[]', space=smem, size = 0x4, offset = 0x4, fixed_abs, tag = 'smem constant byte address 0x4 - core index']
  #allocation1 [shape = 'u32[144,128]{1,0:T(1,128)}', space=vmem, size = 0x12000, scoped, tag = 'internal scratch']
  %s0 = inlined_call_operand.vmem [shape: f32[2,256], index: 0, kind: input, shape index: {}]
  %s1 = inlined_call_operand.vmem [shape: f32[256,256], index: 1, kind: input, shape index: {}]
  %s2 = inlined_call_operand.vmem [shape: f32[1,256], index: 2, kind: input, shape index: {}]
  %s3 = inlined_call_operand.vmem [shape: f32[256,16], index: 3, kind: input, shape index: {}]
  %s4 = inlined_call_operand.vmem [shape: f32[1,16], index: 4, kind: input, shape index: {}]
  %s5 = inlined_call_operand.hbm [shape: f32[2,16], index: 5, kind: output, shape index: {}]
  %s6 = sld [smem:[#allocation0]]
  $region30: #{landmark_mlp_forward.1} parent=0
    _
  %s8 = ssub.s32 1, %s6
  %s9 = scalar_select 0, %s8, %s6
  $region1: #{landmark_mlp_forward.1} parent=0
    #allocation2 [shape = 'u8[1024]{0}', space=vmem, size = 0x400, scoped, tag = 'output window, operand 0, single buffered']
    #allocation3 [shape = 's32[1]{0}', space=sflag, size = 0x4, scoped, tag = 'scoped memory for landmark_mlp_forward.1']
    %10 = vsyncpa [#allocation3], 0
    // Predicated region
    $region2: #{landmark_mlp_forward.1} parent=1 // pred_check
      _
    $region3: #{landmark_mlp_forward.1} parent=1 // pred_check_branch
      %12 = sbr.rel (0) target = $region5
    $region4: #{landmark_mlp_forward.1} parent=1 // pred_region
      _
    $region5: #{landmark_mlp_forward.1} parent=1 // pred_fallthru
      _
    // Predicated region
    $region6: #{landmark_mlp_forward.1} parent=1 // pred_check
      _
    $region7: #{landmark_mlp_forward.1} parent=1 // pred_check_branch
      %14 = sbr.rel (0) target = $region9
    $region8: #{landmark_mlp_forward.1} parent=1 // pred_region
      _
    $region9: #{landmark_mlp_forward.1} parent=1 // pred_fallthru
      _
    // Predicated region
    $region10: #{landmark_mlp_forward.1} parent=1 // pred_check
      _
    $region11: #{landmark_mlp_forward.1} parent=1 // pred_check_branch
      %16 = sbr.rel (0) target = $region13
    $region12: #{landmark_mlp_forward.1} parent=1 // pred_region
      _
    $region13: #{landmark_mlp_forward.1} parent=1 // pred_fallthru
      _
    // Predicated region
    $region14: #{landmark_mlp_forward.1} parent=1 // pred_check
      _
    $region15: #{landmark_mlp_forward.1} parent=1 // pred_check_branch
      %18 = sbr.rel (0) target = $region17
    $region16: #{landmark_mlp_forward.1} parent=1 // pred_region
      _
    $region17: #{landmark_mlp_forward.1} parent=1 // pred_fallthru
      _
    // Predicated region
    $region18: #{landmark_mlp_forward.1} parent=1 // pred_check
      _
    $region19: #{landmark_mlp_forward.1} parent=1 // pred_check_branch
      %20 = sbr.rel (0) target = $region21
    $region20: #{landmark_mlp_forward.1} parent=1 // pred_region
      _
    $region21: #{landmark_mlp_forward.1} parent=1 // pred_fallthru
      _
    %v21 = vld [vmem:[%s0] sm:$0xf]
    %v22 = vld [vmem:[%s1] sm:$0xff]
    %v23 = vld [vmem:[%s1 + $0x8] sm:$0xff]
    %v24 = vld [vmem:[%s1 + $0x10] sm:$0xff]
    %v25 = vld [vmem:[%s1 + $0x18] sm:$0xff]
    %v26 = vld [vmem:[%s1 + $0x20] sm:$0xff]
    %v27 = vld [vmem:[%s1 + $0x28] sm:$0xff]
    %v28 = vld [vmem:[%s1 + $0x30] sm:$0xff]
    %v29 = vld [vmem:[%s1 + $0x38] sm:$0xff]
    %v30 = vld [vmem:[%s1 + $0x40] sm:$0xff]
    %v31 = vld [vmem:[%s1 + $0x48] sm:$0xff]
    %v32 = vld [vmem:[%s1 + $0x50] sm:$0xff]
    %v33 = vld [vmem:[%s1 + $0x58] sm:$0xff]
    %v34 = vld [vmem:[%s1 + $0x60] sm:$0xff]
    %v35 = vld [vmem:[%s1 + $0x68] sm:$0xff]
    %v36 = vld [vmem:[%s1 + $0x70] sm:$0xff]
    %v37 = vld [vmem:[%s1 + $0x78] sm:$0xff]
    %v38 = vld [vmem:[%s1 + $0x80] sm:$0xff]
    %v39 = vld [vmem:[%s1 + $0x88] sm:$0xff]
    %v40 = vld [vmem:[%s1 + $0x90] sm:$0xff]
    %v41 = vld [vmem:[%s1 + $0x98] sm:$0xff]
    %v42 = vld [vmem:[%s1 + $0xa0] sm:$0xff]
    %v43 = vld [vmem:[%s1 + $0xa8] sm:$0xff]
    %v44 = vld [vmem:[%s1 + $0xb0] sm:$0xff]
    %v45 = vld [vmem:[%s1 + $0xb8] sm:$0xff]
    %v46 = vld [vmem:[%s1 + $0xc0] sm:$0xff]
    %v47 = vld [vmem:[%s1 + $0xc8] sm:$0xff]
    %v48 = vld [vmem:[%s1 + $0xd0] sm:$0xff]
    %v49 = vld [vmem:[%s1 + $0xd8] sm:$0xff]
    %v50 = vld [vmem:[%s1 + $0xe0] sm:$0xff]
    %v51 = vld [vmem:[%s1 + $0xe8] sm:$0xff]
    %v52 = vld [vmem:[%s1 + $0xf0] sm:$0xff]
    %v53 = vld [vmem:[%s1 + $0xf8] sm:$0xff]
    %v54 = vld [vmem:[%s1 + $0x100] sm:$0xff]
    %v55 = vld [vmem:[%s1 + $0x108] sm:$0xff]
    %v56 = vld [vmem:[%s1 + $0x110] sm:$0xff]
    %v57 = vld [vmem:[%s1 + $0x118] sm:$0xff]
    %v58 = vld [vmem:[%s1 + $0x120] sm:$0xff]
    %v59 = vld [vmem:[%s1 + $0x128] sm:$0xff]
    %v60 = vld [vmem:[%s1 + $0x130] sm:$0xff]
    %v61 = vld [vmem:[%s1 + $0x138] sm:$0xff]
    %v62 = vld [vmem:[%s1 + $0x140] sm:$0xff]
    %v63 = vld [vmem:[%s1 + $0x148] sm:$0xff]
    %v64 = vld [vmem:[%s1 + $0x150] sm:$0xff]
    %v65 = vld [vmem:[%s1 + $0x158] sm:$0xff]
    %v66 = vld [vmem:[%s1 + $0x160] sm:$0xff]
    %v67 = vld [vmem:[%s1 + $0x168] sm:$0xff]
    %v68 = vld [vmem:[%s1 + $0x170] sm:$0xff]
    %v69 = vld [vmem:[%s1 + $0x178] sm:$0xff]
    %v70 = vld [vmem:[%s1 + $0x180] sm:$0xff]
    %v71 = vld [vmem:[%s1 + $0x188] sm:$0xff]
    %v72 = vld [vmem:[%s1 + $0x190] sm:$0xff]
    %v73 = vld [vmem:[%s1 + $0x198] sm:$0xff]
    %v74 = vld [vmem:[%s1 + $0x1a0] sm:$0xff]
    %v75 = vld [vmem:[%s1 + $0x1a8] sm:$0xff]
    %v76 = vld [vmem:[%s1 + $0x1b0] sm:$0xff]
    %v77 = vld [vmem:[%s1 + $0x1b8] sm:$0xff]
    %v78 = vld [vmem:[%s1 + $0x1c0] sm:$0xff]
    %v79 = vld [vmem:[%s1 + $0x1c8] sm:$0xff]
    %v80 = vld [vmem:[%s1 + $0x1d0] sm:$0xff]
    %v81 = vld [vmem:[%s1 + $0x1d8] sm:$0xff]
    %v82 = vld [vmem:[%s1 + $0x1e0] sm:$0xff]
    %v83 = vld [vmem:[%s1 + $0x1e8] sm:$0xff]
    %v84 = vld [vmem:[%s1 + $0x1f0] sm:$0xff]
    %v85 = vld [vmem:[%s1 + $0x1f8] sm:$0xff]
    %v86 = vld [vmem:[%s2] sm:$0x3]
    %v88 = vlaneseq
    %v89 = vshrl.u32 %v88, 7
    %v90 = vsub.s32 0, %v89
    %v91 = vrot.slane %v86, %v90
    %v92 = vlaneseq
    %v93 = vshrl.u32 %v92, 7
    %v94 = vsub.s32 1, %v93
    %v95 = vrot.slane %v86, %v94
    %v100 = vunpack.c.l.s4 1983009808
    %v101 = vunpack.c.0.s8 %v100
    %v102 = vlaneseq
    %v103 = vshrl.u32 %v102, 7
    %v104 = vsub.s32 %v101, %v103
    %v105 = vrot.slane %v21, %v104
    %v106 = vcombine.high %v105, %v105
    %109 = vmatprep.subr.mxu0 %v23
    %110 = vmatpush1.msra.mxu0 %v22
    %111 = vmatprep.subr.mxu0 %v25
    %112 = vmatpush1.msra.mxu0 %v24
    %113 = vmatprep.subr.mxu0 %v27
    %114 = vmatpush1.msra.mxu0 %v26
    %115 = vmatprep.subr.mxu0 %v29
    %116 = vmatpush1.msra.mxu0 %v28
    %117 = vmatprep.subr.mxu0 %v31
    %118 = vmatpush1.msra.mxu0 %v30
    %119 = vmatprep.subr.mxu0 %v33
    %120 = vmatpush1.msra.mxu0 %v32
    %121 = vmatprep.subr.mxu0 %v35
    %122 = vmatpush1.msra.mxu0 %v34
    %123 = vmatprep.subr.mxu0 %v37
    %124 = vmatpush1.msra.mxu0 %v36
    %125 = vmatprep.subr.mxu0 %v39
    %126 = vmatpush1.msra.mxu0 %v38
    %127 = vmatprep.subr.mxu0 %v41
    %128 = vmatpush1.msra.mxu0 %v40
    %129 = vmatprep.subr.mxu0 %v43
    %130 = vmatpush1.msra.mxu0 %v42
    %131 = vmatprep.subr.mxu0 %v45
    %132 = vmatpush1.msra.mxu0 %v44
    %133 = vmatprep.subr.mxu0 %v47
    %134 = vmatpush1.msra.mxu0 %v46
    %135 = vmatprep.subr.mxu0 %v49
    %136 = vmatpush1.msra.mxu0 %v48
    %137 = vmatprep.subr.mxu0 %v51
    %138 = vmatpush1.msra.mxu0 %v50
    %139 = vmatprep.subr.mxu0 %v53
    %140 = vmatpush1.msra.mxu0 %v52
    %141 = vmatprep.subr.mxu0 %v55
    %142 = vmatpush1.msra.mxu0 %v54
    %143 = vmatprep.subr.mxu0 %v57
    %144 = vmatpush1.msra.mxu0 %v56
    %145 = vmatprep.subr.mxu0 %v59
    %146 = vmatpush1.msra.mxu0 %v58
    %147 = vmatprep.subr.mxu0 %v61
    %148 = vmatpush1.msra.mxu0 %v60
    %149 = vmatprep.subr.mxu0 %v63
    %150 = vmatpush1.msra.mxu0 %v62
    %151 = vmatprep.subr.mxu0 %v65
    %152 = vmatpush1.msra.mxu0 %v64
    %153 = vmatprep.subr.mxu0 %v67
    %154 = vmatpush1.msra.mxu0 %v66
    %155 = vmatprep.subr.mxu0 %v69
    %156 = vmatpush1.msra.mxu0 %v68
    %157 = vmatprep.subr.mxu0 %v71
    %158 = vmatpush1.msra.mxu0 %v70
    %159 = vmatprep.subr.mxu0 %v73
    %160 = vmatpush1.msra.mxu0 %v72
    %161 = vmatprep.subr.mxu0 %v75
    %162 = vmatpush1.msra.mxu0 %v74
    %163 = vmatprep.subr.mxu0 %v77
    %164 = vmatpush1.msra.mxu0 %v76
    %165 = vmatprep.subr.mxu0 %v79
    %166 = vmatpush1.msra.mxu0 %v78
    %167 = vmatprep.subr.mxu0 %v81
    %168 = vmatpush1.msra.mxu0 %v80
    %169 = vmatprep.subr.mxu0 %v83
    %170 = vmatpush1.msra.mxu0 %v82
    %171 = vmatprep.subr.mxu0 %v85
    %172 = vmatpush1.msra.mxu0 %v84
    %173 = vmatprep.mubr.f32.mxu0 %v106
    %174 = vmatmul.mubr.f32.gmra.mrb[0].mxu0 %v105
    %v175 = vpop.f32.mrb[0].mxu0
    %v176 = vadd.f32 %v91, %v175
    %v177 = vpop.f32.mrb[0].mxu0
    %v178 = vadd.f32 %v95, %v177
    %179 = vdwg.mxu0
    %v180 = vmul.f32 %v176, 0.5
    %v181 = vmul.f32 %v178, 0.5
    %v182 = vmul.f32 %v176, 0.70710677
    %v183 = vmul.f32 %v178, 0.70710677
    %v184 = verf.f32.pop %v182
    %v185 = verf.f32.pop %v183
    %v186 = vadd.f32 %v184, 1.0
    %v187 = vadd.f32 %v185, 1.0
    %v188 = vmul.f32 %v180, %v186
    %v189 = vmul.f32 %v181, %v187
    %v190 = vld [vmem:[%s3] sm:$0xff]
    %v191 = vld [vmem:[%s3 + $0x8] sm:$0xff]
    %v192 = vld [vmem:[%s3 + $0x10] sm:$0xff]
    %v193 = vld [vmem:[%s3 + $0x18] sm:$0xff]
    %v194 = vld [vmem:[%s3 + $0x20] sm:$0xff]
    %v195 = vld [vmem:[%s3 + $0x28] sm:$0xff]
    %v196 = vld [vmem:[%s3 + $0x30] sm:$0xff]
    %v197 = vld [vmem:[%s3 + $0x38] sm:$0xff]
    %v198 = vld [vmem:[%s3 + $0x40] sm:$0xff]
    %v199 = vld [vmem:[%s3 + $0x48] sm:$0xff]
    %v200 = vld [vmem:[%s3 + $0x50] sm:$0xff]
    %v201 = vld [vmem:[%s3 + $0x58] sm:$0xff]
    %v202 = vld [vmem:[%s3 + $0x60] sm:$0xff]
    %v203 = vld [vmem:[%s3 + $0x68] sm:$0xff]
    %v204 = vld [vmem:[%s3 + $0x70] sm:$0xff]
    %v205 = vld [vmem:[%s3 + $0x78] sm:$0xff]
    %v206 = vld [vmem:[%s3 + $0x80] sm:$0xff]
    %v207 = vld [vmem:[%s3 + $0x88] sm:$0xff]
    %v208 = vld [vmem:[%s3 + $0x90] sm:$0xff]
    %v209 = vld [vmem:[%s3 + $0x98] sm:$0xff]
    %v210 = vld [vmem:[%s3 + $0xa0] sm:$0xff]
    %v211 = vld [vmem:[%s3 + $0xa8] sm:$0xff]
    %v212 = vld [vmem:[%s3 + $0xb0] sm:$0xff]
    %v213 = vld [vmem:[%s3 + $0xb8] sm:$0xff]
    %v214 = vld [vmem:[%s3 + $0xc0] sm:$0xff]
    %v215 = vld [vmem:[%s3 + $0xc8] sm:$0xff]
    %v216 = vld [vmem:[%s3 + $0xd0] sm:$0xff]
    %v217 = vld [vmem:[%s3 + $0xd8] sm:$0xff]
    %v218 = vld [vmem:[%s3 + $0xe0] sm:$0xff]
    %v219 = vld [vmem:[%s3 + $0xe8] sm:$0xff]
    %v220 = vld [vmem:[%s3 + $0xf0] sm:$0xff]
    %v221 = vld [vmem:[%s3 + $0xf8] sm:$0xff]
    %v222 = vld [vmem:[%s4] sm:$0x1]
    %v224 = vlaneseq
    %v225 = vshrl.u32 %v224, 7
    %v226 = vsub.s32 0, %v225
    %v227 = vrot.slane %v222, %v226
    %229 = vmatprep.subr.mxu0 0.0
    %230 = vmatpush1.msra.mxu0 %v190
    %231 = vmatprep.subr.mxu0 0.0
    %232 = vmatpush1.msra.mxu0 %v191
    %233 = vmatprep.subr.mxu0 0.0
    %234 = vmatpush1.msra.mxu0 %v192
    %235 = vmatprep.subr.mxu0 0.0
    %236 = vmatpush1.msra.mxu0 %v193
    %237 = vmatprep.subr.mxu0 0.0
    %238 = vmatpush1.msra.mxu0 %v194
    %239 = vmatprep.subr.mxu0 0.0
    %240 = vmatpush1.msra.mxu0 %v195
    %241 = vmatprep.subr.mxu0 0.0
    %242 = vmatpush1.msra.mxu0 %v196
    %243 = vmatprep.subr.mxu0 0.0
    %244 = vmatpush1.msra.mxu0 %v197
    %245 = vmatprep.subr.mxu0 0.0
    %246 = vmatpush1.msra.mxu0 %v198
    %247 = vmatprep.subr.mxu0 0.0
    %248 = vmatpush1.msra.mxu0 %v199
    %249 = vmatprep.subr.mxu0 0.0
    %250 = vmatpush1.msra.mxu0 %v200
    %251 = vmatprep.subr.mxu0 0.0
    %252 = vmatpush1.msra.mxu0 %v201
    %253 = vmatprep.subr.mxu0 0.0
    %254 = vmatpush1.msra.mxu0 %v202
    %255 = vmatprep.subr.mxu0 0.0
    %256 = vmatpush1.msra.mxu0 %v203
    %257 = vmatprep.subr.mxu0 0.0
    %258 = vmatpush1.msra.mxu0 %v204
    %259 = vmatprep.subr.mxu0 0.0
    %260 = vmatpush1.msra.mxu0 %v205
    %261 = vmatprep.subr.mxu0 0.0
    %262 = vmatpush1.msra.mxu0 %v206
    %263 = vmatprep.subr.mxu0 0.0
    %264 = vmatpush1.msra.mxu0 %v207
    %265 = vmatprep.subr.mxu0 0.0
    %266 = vmatpush1.msra.mxu0 %v208
    %267 = vmatprep.subr.mxu0 0.0
    %268 = vmatpush1.msra.mxu0 %v209
    %269 = vmatprep.subr.mxu0 0.0
    %270 = vmatpush1.msra.mxu0 %v210
    %271 = vmatprep.subr.mxu0 0.0
    %272 = vmatpush1.msra.mxu0 %v211
    %273 = vmatprep.subr.mxu0 0.0
    %274 = vmatpush1.msra.mxu0 %v212
    %275 = vmatprep.subr.mxu0 0.0
    %276 = vmatpush1.msra.mxu0 %v213
    %277 = vmatprep.subr.mxu0 0.0
    %278 = vmatpush1.msra.mxu0 %v214
    %279 = vmatprep.subr.mxu0 0.0
    %280 = vmatpush1.msra.mxu0 %v215
    %281 = vmatprep.subr.mxu0 0.0
    %282 = vmatpush1.msra.mxu0 %v216
    %283 = vmatprep.subr.mxu0 0.0
    %284 = vmatpush1.msra.mxu0 %v217
    %285 = vmatprep.subr.mxu0 0.0
    %286 = vmatpush1.msra.mxu0 %v218
    %287 = vmatprep.subr.mxu0 0.0
    %288 = vmatpush1.msra.mxu0 %v219
    %289 = vmatprep.subr.mxu0 0.0
    %290 = vmatpush1.msra.mxu0 %v220
    %291 = vmatprep.subr.mxu0 0.0
    %292 = vmatpush1.msra.mxu0 %v221
    %293 = vmatprep.mubr.f32.mxu0 %v189
    %294 = vmatmul.mubr.f32.gmra.mrb[0].mxu0 %v188
    %v295 = vpop.f32.mrb[0].mxu0
    %v296 = vadd.f32 %v227, %v295
    %v297 = vpop.f32.mrb[0].mxu0
    %298 = vdwg.mxu0
    %vm299 = vcmask 123904
    %300 = vst.msk [vmem:[#allocation2] sm:$0x3] %vm299, %v296
    // Predicated region
    $region22: #{landmark_mlp_forward.1} parent=1 // pred_check
      _
    $region23: #{landmark_mlp_forward.1} parent=1 // pred_check_branch
      %302 = sbr.rel (0) target = $region25
    $region24: #{landmark_mlp_forward.1} parent=1 // pred_region
      %s304 = ssub.s32 32, 32
      %305 = vsyncadd [#allocation3], %s304
      %s307 = sshll.u32 [#allocation2], 4
      %s308 = int_to_ptr.vmem [resolvable:$true] %s307
      %310 = dma.vmem_to_hbm [thread:$0]  %s308, 32, %s5, [#allocation3]
    $region25: #{landmark_mlp_forward.1} parent=1 // pred_fallthru
      _
    // Predicated region
    $region26: #{landmark_mlp_forward.1} parent=1 // pred_check
      _
    $region27: #{landmark_mlp_forward.1} parent=1 // pred_check_branch
      %312 = sbr.rel (0) target = $region29
    $region28: #{landmark_mlp_forward.1} parent=1 // pred_region
      %313 = dma.done [#allocation3], 32
    $region29: #{landmark_mlp_forward.1} parent=1 // pred_fallthru
      _
    %314 = vsyncpa [#allocation3], 1

</llo_original>
